<compile_context>
chip_gen: v6e
topology: v6e:2x2x1
jax: 0.10.0
libtpu: 0.0.40
codegen_flags: <defaults>
</compile_context>

<pallas_src>
import jax
import jax.numpy as jnp
from jax.experimental import pallas as pl
from jax.experimental.pallas import tpu as pltpu

LANE = 128


def _round_up(x, m):
    return (x + m - 1) // m * m


def _actor_mlp_kernel(x_ref, w1_ref, b1_ref, w2_ref, b2_ref, w3_ref, b3_ref, o_ref):
    # x arrives f32; cast to bf16 in-kernel (cheap VPU op, hidden under HBM traffic).
    x = x_ref[...].astype(jnp.bfloat16)                                  # (TB, obs_dim)

    h1 = jnp.dot(x, w1_ref[...], preferred_element_type=jnp.float32) + b1_ref[...]
    h1 = jnp.maximum(h1, 0.0)                                            # f32 VPU

    h2 = jnp.dot(h1.astype(jnp.bfloat16), w2_ref[...],
                 preferred_element_type=jnp.float32) + b2_ref[...]
    h2 = jnp.maximum(h2, 0.0)

    h3 = jnp.dot(h2.astype(jnp.bfloat16), w3_ref[...],
                 preferred_element_type=jnp.float32)                     # (TB, 128) f32

    d_out = o_ref.shape[1]                                               # 2 live columns
    o_ref[...] = jnp.tanh(h3[:, :d_out] + b3_ref[...])                   # tiny (TB, 2) store


def actor_network_forward(obs, params, *, tb_max=2048):
    """obs: (B, obs_dim) float32. params: dict of w1,b1,w2,b2,w3,b3 ((in,out) weights)."""
    w1, b1, w2, b2, w3, b3 = (params[k] for k in ("w1", "b1", "w2", "b2", "w3", "b3"))
    B, obs_dim = obs.shape
    d1, d2, d_out = w1.shape[1], w2.shape[1], w3.shape[1]

    # --- pad hidden feature dims to lane width (zeros -> numerically exact) ---
    d1p, d2p = _round_up(d1, LANE), _round_up(d2, LANE)

    def pad2(a, shape, dtype):
        return jnp.zeros(shape, dtype).at[: a.shape[0], : a.shape[1]].set(a.astype(dtype))

    w1p = pad2(w1, (obs_dim, d1p), jnp.bfloat16)
    w2p = pad2(w2, (d1p, d2p), jnp.bfloat16)
    w3p = pad2(w3, (d2p, LANE), jnp.bfloat16)        # 128-lane N for the MXU; only 2 cols live
    b1p = pad2(b1, (1, d1p), jnp.float32)
    b2p = pad2(b2, (1, d2p), jnp.float32)
    b3f = b3.reshape(1, d_out).astype(jnp.float32)   # applied only to the 2 live columns

    # --- batch tiling ---
    # Round to 16 rows (bf16 vreg = (16,128) sublane packing). Pick TB so that large
    # batches produce >= 2 grid steps (v7x: 2 TCs), capped at tb_max (per-step overhead
    # amortization; VMEM footprint stays tiny even at 2048).
    B16 = _round_up(B, 16)
    half = _round_up((B16 + 1) // 2, 16)
    TB = max(16, min(tb_max, half))
    Bp = _round_up(B16, TB)

    if Bp == B:
        obs_p = obs                                   # no pad/cast round trip through HBM
    else:
        obs_p = jnp.zeros((Bp, obs_dim), obs.dtype).at[:B].set(obs)

    grid = (Bp // TB,)
    const = lambda shape: pl.BlockSpec(shape, lambda i: (0, 0))  # VMEM-resident across steps

    flops = 2 * Bp * (obs_dim * d1p + d1p * d2p + d2p * LANE)
    bytes_accessed = (
        Bp * obs_dim * 4
        + (w1p.size + w2p.size + w3p.size) * 2
        + (b1p.size + b2p.size) * 4 + b3f.size * 4
        + Bp * d_out * 4
    )

    out = pl.pallas_call(
        _actor_mlp_kernel,
        out_shape=jax.ShapeDtypeStruct((Bp, d_out), jnp.float32),
        grid=grid,
        in_specs=[
            pl.BlockSpec((TB, obs_dim), lambda i: (i, 0)),
            const(w1p.shape), const(b1p.shape),
            const(w2p.shape), const(b2p.shape),
            const(w3p.shape), const(b3f.shape),
        ],
        out_specs=pl.BlockSpec((TB, d_out), lambda i: (i, 0)),
        compiler_params=pltpu.CompilerParams(dimension_semantics=("parallel",)),
        cost_estimate=pl.CostEstimate(
            flops=int(flops),
            transcendentals=int(Bp * d_out),
            bytes_accessed=int(bytes_accessed),
        ),
    )(obs_p, w1p, b1p, w2p, b2p, w3p, b3f)

    return out if Bp == B else out[:B]


def init_params(key, obs_dim, hidden_state=(64, 32)):
    """Mirrors PyTorch nn.Linear default init (U[-1/sqrt(fan_in), 1/sqrt(fan_in)])."""
    dims = [obs_dim, hidden_state[0], hidden_state[1], 2]
    params = {}
    keys = jax.random.split(key, 6)
    for i in range(3):
        fan_in = dims[i]
        bound = 1.0 / jnp.sqrt(jnp.float32(fan_in))
        params[f"w{i + 1}"] = jax.random.uniform(
            keys[2 * i], (dims[i], dims[i + 1]), minval=-bound, maxval=bound, dtype=jnp.float32)
        params[f"b{i + 1}"] = jax.random.uniform(
            keys[2 * i + 1], (1, dims[i + 1]), minval=-bound, maxval=bound, dtype=jnp.float32)
    return params


if __name__ == "__main__":
    key = jax.random.PRNGKey(0)
    k_obs, k_par = jax.random.split(key)

    batch = 8
    obs_dim = 16
    hidden = (64, 32)

    obs = jax.random.normal(k_obs, (batch, obs_dim), dtype=jnp.float32)
    params = init_params(k_par, obs_dim, hidden)

    out = actor_network_forward(obs, params)
    jax.block_until_ready(out)

    # Pure-JAX f32 reference (kernel uses bf16 MXU operands -> relaxed tolerance).
    def ref(x, p):
        h = jnp.maximum(x @ p["w1"] + p["b1"], 0.0)
        h = jnp.maximum(h @ p["w2"] + p["b2"], 0.0)
        return jnp.tanh(h @ p["w3"] + p["b3"])

    expected = ref(obs, params)
    assert out.shape == (batch, 2), out.shape
    assert jnp.allclose(out, expected, atol=3e-2, rtol=3e-2), (
        float(jnp.max(jnp.abs(out - expected))))

    print("KERNEL_OK")
</pallas_src>

<mosaic_0001>
module attributes {stable_mosaic.version = 11 : i64} {
  func.func @_actor_mlp_kernel(%arg0: i32, %arg1: memref<16x16xf32, #tpu.memory_space<vmem>>, %arg2: memref<16x128xbf16, #tpu.memory_space<vmem>>, %arg3: memref<1x128xf32, #tpu.memory_space<vmem>>, %arg4: memref<128x128xbf16, #tpu.memory_space<vmem>>, %arg5: memref<1x128xf32, #tpu.memory_space<vmem>>, %arg6: memref<128x128xbf16, #tpu.memory_space<vmem>>, %arg7: memref<1x2xf32, #tpu.memory_space<vmem>>, %arg8: memref<16x2xf32, #tpu.memory_space<vmem>>) attributes {dimension_semantics = [#tpu.dimension_semantics<parallel>], iteration_bounds = array<i64: 1>, scalar_prefetch = 0 : i64, scratch_operands = 0 : i64, tpu.core_type = #tpu.core_type<tc>, window_params = [{transform_indices = @transform_0, window_bounds = array<i64: 16, 16>}, {pipeline_mode = #tpu.pipeline_mode<synchronous>, transform_indices = @transform_1, window_bounds = array<i64: 16, 128>}, {pipeline_mode = #tpu.pipeline_mode<synchronous>, transform_indices = @transform_2, window_bounds = array<i64: 1, 128>}, {pipeline_mode = #tpu.pipeline_mode<synchronous>, transform_indices = @transform_3, window_bounds = array<i64: 128, 128>}, {pipeline_mode = #tpu.pipeline_mode<synchronous>, transform_indices = @transform_4, window_bounds = array<i64: 1, 128>}, {pipeline_mode = #tpu.pipeline_mode<synchronous>, transform_indices = @transform_5, window_bounds = array<i64: 128, 128>}, {pipeline_mode = #tpu.pipeline_mode<synchronous>, transform_indices = @transform_6, window_bounds = array<i64: 1, 2>}, {transform_indices = @transform_7, window_bounds = array<i64: 16, 2>}]} {
    %c0 = arith.constant 0 : index
    %c0_0 = arith.constant 0 : index
    %0 = vector.load %arg1[%c0, %c0_0] : memref<16x16xf32, #tpu.memory_space<vmem>>, vector<16x16xf32>
    %1 = arith.truncf %0 : vector<16x16xf32> to vector<16x16xbf16>
    %c0_1 = arith.constant 0 : index
    %c0_2 = arith.constant 0 : index
    %2 = vector.load %arg2[%c0_1, %c0_2] : memref<16x128xbf16, #tpu.memory_space<vmem>>, vector<16x128xbf16>
    %cst = arith.constant dense<0.000000e+00> : vector<16x128xf32>
    %3 = tpu.matmul %1, %2, %cst {dimension_numbers = #tpu.dot_dimension_numbers<[1], [0], [0], [1], [0, 0, 1, 1], [], []>} : vector<16x16xbf16>, vector<16x128xbf16>, vector<16x128xf32> -> vector<16x128xf32>
    %c0_3 = arith.constant 0 : index
    %c0_4 = arith.constant 0 : index
    %4 = vector.load %arg3[%c0_3, %c0_4] : memref<1x128xf32, #tpu.memory_space<vmem>>, vector<1x128xf32>
    %5 = vector.broadcast %4 : vector<1x128xf32> to vector<16x128xf32>
    %6 = arith.addf %3, %5 : vector<16x128xf32>
    %cst_5 = arith.constant 0.000000e+00 : f32
    %7 = vector.broadcast %cst_5 : f32 to vector<16x128xf32>
    %8 = arith.maximumf %6, %7 : vector<16x128xf32>
    %9 = arith.truncf %8 : vector<16x128xf32> to vector<16x128xbf16>
    %c0_6 = arith.constant 0 : index
    %c0_7 = arith.constant 0 : index
    %10 = vector.load %arg4[%c0_6, %c0_7] : memref<128x128xbf16, #tpu.memory_space<vmem>>, vector<128x128xbf16>
    %cst_8 = arith.constant dense<0.000000e+00> : vector<16x128xf32>
    %11 = tpu.matmul %9, %10, %cst_8 {dimension_numbers = #tpu.dot_dimension_numbers<[1], [0], [0], [1], [0, 0, 1, 1], [], []>} : vector<16x128xbf16>, vector<128x128xbf16>, vector<16x128xf32> -> vector<16x128xf32>
    %c0_9 = arith.constant 0 : index
    %c0_10 = arith.constant 0 : index
    %12 = vector.load %arg5[%c0_9, %c0_10] : memref<1x128xf32, #tpu.memory_space<vmem>>, vector<1x128xf32>
    %13 = vector.broadcast %12 : vector<1x128xf32> to vector<16x128xf32>
    %14 = arith.addf %11, %13 : vector<16x128xf32>
    %cst_11 = arith.constant 0.000000e+00 : f32
    %15 = vector.broadcast %cst_11 : f32 to vector<16x128xf32>
    %16 = arith.maximumf %14, %15 : vector<16x128xf32>
    %17 = arith.truncf %16 : vector<16x128xf32> to vector<16x128xbf16>
    %c0_12 = arith.constant 0 : index
    %c0_13 = arith.constant 0 : index
    %18 = vector.load %arg6[%c0_12, %c0_13] : memref<128x128xbf16, #tpu.memory_space<vmem>>, vector<128x128xbf16>
    %cst_14 = arith.constant dense<0.000000e+00> : vector<16x128xf32>
    %19 = tpu.matmul %17, %18, %cst_14 {dimension_numbers = #tpu.dot_dimension_numbers<[1], [0], [0], [1], [0, 0, 1, 1], [], []>} : vector<16x128xbf16>, vector<128x128xbf16>, vector<16x128xf32> -> vector<16x128xf32>
    %20 = vector.extract_strided_slice %19 {offsets = [0, 0], sizes = [16, 2], strides = [1, 1]} : vector<16x128xf32> to vector<16x2xf32>
    %c0_15 = arith.constant 0 : index
    %c0_16 = arith.constant 0 : index
    %21 = vector.load %arg7[%c0_15, %c0_16] : memref<1x2xf32, #tpu.memory_space<vmem>>, vector<1x2xf32>
    %22 = vector.broadcast %21 : vector<1x2xf32> to vector<16x2xf32>
    %23 = arith.addf %20, %22 : vector<16x2xf32>
    %24 = math.tanh %23 : vector<16x2xf32>
    %c0_17 = arith.constant 0 : index
    %c0_18 = arith.constant 0 : index
    %25 = vector.load %arg8[%c0_17, %c0_18] : memref<16x2xf32, #tpu.memory_space<vmem>>, vector<16x2xf32>
    tpu.vector_store %arg8[%c0_17, %c0_18], %24 {strides = array<i32>} : memref<16x2xf32, #tpu.memory_space<vmem>>, vector<16x2xf32>,
    return
  }
  func.func @transform_0(%arg0: i32) -> (i32, i32) {
    %c0_i32 = arith.constant 0 : i32
    %c0_i32_0 = arith.constant 0 : i32
    return %arg0, %c0_i32 : i32, i32
  }
  func.func @transform_1(%arg0: i32) -> (i32, i32) {
    %c0_i32 = arith.constant 0 : i32
    %c0_i32_0 = arith.constant 0 : i32
    %c0_i32_1 = arith.constant 0 : i32
    return %c0_i32, %c0_i32_0 : i32, i32
  }
  func.func @transform_2(%arg0: i32) -> (i32, i32) {
    %c0_i32 = arith.constant 0 : i32
    %c0_i32_0 = arith.constant 0 : i32
    %c0_i32_1 = arith.constant 0 : i32
    return %c0_i32, %c0_i32_0 : i32, i32
  }
  func.func @transform_3(%arg0: i32) -> (i32, i32) {
    %c0_i32 = arith.constant 0 : i32
    %c0_i32_0 = arith.constant 0 : i32
    %c0_i32_1 = arith.constant 0 : i32
    return %c0_i32, %c0_i32_0 : i32, i32
  }
  func.func @transform_4(%arg0: i32) -> (i32, i32) {
    %c0_i32 = arith.constant 0 : i32
    %c0_i32_0 = arith.constant 0 : i32
    %c0_i32_1 = arith.constant 0 : i32
    return %c0_i32, %c0_i32_0 : i32, i32
  }
  func.func @transform_5(%arg0: i32) -> (i32, i32) {
    %c0_i32 = arith.constant 0 : i32
    %c0_i32_0 = arith.constant 0 : i32
    %c0_i32_1 = arith.constant 0 : i32
    return %c0_i32, %c0_i32_0 : i32, i32
  }
  func.func @transform_6(%arg0: i32) -> (i32, i32) {
    %c0_i32 = arith.constant 0 : i32
    %c0_i32_0 = arith.constant 0 : i32
    %c0_i32_1 = arith.constant 0 : i32
    return %c0_i32, %c0_i32_0 : i32, i32
  }
  func.func @transform_7(%arg0: i32) -> (i32, i32) {
    %c0_i32 = arith.constant 0 : i32
    %c0_i32_0 = arith.constant 0 : i32
    return %arg0, %c0_i32 : i32, i32
  }
}

</mosaic_0001>

<llo_original>
// kernel: tpu_custom_call.1
$region0: #{tpu_custom_call.1}
  #allocation0 [shape = 'u32[]', space=smem, size = 0x4, offset = 0x4, fixed_abs, tag = 'smem constant byte address 0x4 - core index']
  #allocation1 [shape = 'u32[144,128]{1,0:T(1,128)}', space=vmem, size = 0x12000, scoped, tag = 'internal scratch']
  %s0 = inlined_call_operand.hbm [shape: f32[16,16], index: 0, kind: input, shape index: {}]
  %s1 = inlined_call_operand.hbm [shape: bf16[16,128], index: 1, kind: input, shape index: {}]
  %s2 = inlined_call_operand.vmem [shape: f32[1,128], index: 2, kind: input, shape index: {}]
  %s3 = inlined_call_operand.hbm [shape: bf16[128,128], index: 3, kind: input, shape index: {}]
  %s4 = inlined_call_operand.vmem [shape: f32[1,128], index: 4, kind: input, shape index: {}]
  %s5 = inlined_call_operand.hbm [shape: bf16[128,128], index: 5, kind: input, shape index: {}]
  %s6 = inlined_call_operand.vmem [shape: f32[1,2], index: 6, kind: input, shape index: {}]
  %s7 = inlined_call_operand.vmem [shape: f32[16,2], index: 7, kind: output, shape index: {}]
  %s8 = sld [smem:[#allocation0]]
  $region54: #{tpu_custom_call.1} parent=0
    _
  %s10 = ssub.s32 1, %s8
  %s11 = scalar_select 0, %s10, %s8
  $region1: #{tpu_custom_call.1} parent=0
    #allocation2 [shape = 'u8[8192]{0}', space=vmem, size = 0x2000, scoped, tag = 'input window, operand 0, single buffered']
    #allocation3 [shape = 's32[1]{0}', space=sflag, size = 0x4, scoped, tag = 'scoped memory for tpu_custom_call.1']
    #allocation4 [shape = 'u8[4096]{0}', space=vmem, size = 0x1000, scoped, tag = 'input window, operand 1, single buffered']
    #allocation5 [shape = 's32[1]{0}', space=sflag, size = 0x4, scoped, tag = 'scoped memory for tpu_custom_call.1']
    #allocation6 [shape = 'u8[32768]{0}', space=vmem, size = 0x8000, scoped, tag = 'input window, operand 3, single buffered']
    #allocation7 [shape = 'u8[32768]{0}', space=vmem, size = 0x8000, scoped, tag = 'input window, operand 5, single buffered']
    #allocation8 [shape = 's32[1]{0}', space=sflag, size = 0x4, scoped, tag = 'scoped memory for tpu_custom_call.1']
    %12 = vsyncpa [#allocation3], 0
    %13 = vsyncpa [#allocation5], 0
    %14 = vsyncpa [#allocation8], 0
    // Predicated region
    $region2: #{tpu_custom_call.1} parent=1 // pred_check
      _
    $region3: #{tpu_custom_call.1} parent=1 // pred_check_branch
      %16 = sbr.rel (0) target = $region5
    $region4: #{tpu_custom_call.1} parent=1 // pred_region
      %s18 = ssub.s32 256, 256
      %19 = vsyncadd [#allocation3], %s18
      %s20 = sshll.u32 [#allocation2], 4
      %s21 = int_to_ptr.vmem [resolvable:$true] %s20
      %26 = dma.hbm_to_vmem [thread:$0]  %s0, 256, %s21, [#allocation3], 128, 128, 8
    $region5: #{tpu_custom_call.1} parent=1 // pred_fallthru
      _
    // Predicated region
    $region6: #{tpu_custom_call.1} parent=1 // pred_check
      _
    $region7: #{tpu_custom_call.1} parent=1 // pred_check_branch
      %28 = sbr.rel (0) target = $region9
    $region8: #{tpu_custom_call.1} parent=1 // pred_region
      %s30 = ssub.s32 128, 128
      %31 = vsyncadd [#allocation5], %s30
      %s32 = sshll.u32 [#allocation4], 4
      %s33 = int_to_ptr.vmem [resolvable:$true] %s32
      %38 = dma.hbm_to_vmem [thread:$0]  %s1, 128, %s33, [#allocation5], 64, 64, 4
    $region9: #{tpu_custom_call.1} parent=1 // pred_fallthru
      _
    // Predicated region
    $region10: #{tpu_custom_call.1} parent=1 // pred_check
      _
    $region11: #{tpu_custom_call.1} parent=1 // pred_check_branch
      %40 = sbr.rel (0) target = $region13
    $region12: #{tpu_custom_call.1} parent=1 // pred_region
      _
    $region13: #{tpu_custom_call.1} parent=1 // pred_fallthru
      _
    // Predicated region
    $region14: #{tpu_custom_call.1} parent=1 // pred_check
      _
    $region15: #{tpu_custom_call.1} parent=1 // pred_check_branch
      %42 = sbr.rel (0) target = $region17
    $region16: #{tpu_custom_call.1} parent=1 // pred_region
      %s44 = ssub.s32 1024, 1024
      %45 = vsyncadd [#allocation5], %s44
      %s46 = sshll.u32 [#allocation6], 4
      %s47 = int_to_ptr.vmem [resolvable:$true] %s46
      %52 = dma.hbm_to_vmem [thread:$0]  %s3, 1024, %s47, [#allocation5], 64, 64, 4
    $region17: #{tpu_custom_call.1} parent=1 // pred_fallthru
      _
    // Predicated region
    $region18: #{tpu_custom_call.1} parent=1 // pred_check
      _
    $region19: #{tpu_custom_call.1} parent=1 // pred_check_branch
      %54 = sbr.rel (0) target = $region21
    $region20: #{tpu_custom_call.1} parent=1 // pred_region
      _
    $region21: #{tpu_custom_call.1} parent=1 // pred_fallthru
      _
    // Predicated region
    $region22: #{tpu_custom_call.1} parent=1 // pred_check
      _
    $region23: #{tpu_custom_call.1} parent=1 // pred_check_branch
      %56 = sbr.rel (0) target = $region25
    $region24: #{tpu_custom_call.1} parent=1 // pred_region
      %s58 = ssub.s32 1024, 1024
      %59 = vsyncadd [#allocation8], %s58
      %s60 = sshll.u32 [#allocation7], 4
      %s61 = int_to_ptr.vmem [resolvable:$true] %s60
      %66 = dma.hbm_to_vmem [thread:$0]  %s5, 1024, %s61, [#allocation8], 64, 64, 4
    $region25: #{tpu_custom_call.1} parent=1 // pred_fallthru
      _
    // Predicated region
    $region26: #{tpu_custom_call.1} parent=1 // pred_check
      _
    $region27: #{tpu_custom_call.1} parent=1 // pred_check_branch
      %68 = sbr.rel (0) target = $region29
    $region28: #{tpu_custom_call.1} parent=1 // pred_region
      _
    $region29: #{tpu_custom_call.1} parent=1 // pred_fallthru
      _
    // Predicated region
    $region30: #{tpu_custom_call.1} parent=1 // pred_check
      _
    $region31: #{tpu_custom_call.1} parent=1 // pred_check_branch
      %70 = sbr.rel (0) target = $region33
    $region32: #{tpu_custom_call.1} parent=1 // pred_region
      %71 = dma.done [#allocation3], 256
    $region33: #{tpu_custom_call.1} parent=1 // pred_fallthru
      _
    // Predicated region
    $region34: #{tpu_custom_call.1} parent=1 // pred_check
      _
    $region35: #{tpu_custom_call.1} parent=1 // pred_check_branch
      %73 = sbr.rel (0) target = $region37
    $region36: #{tpu_custom_call.1} parent=1 // pred_region
      %74 = dma.done [#allocation5], 128
    $region37: #{tpu_custom_call.1} parent=1 // pred_fallthru
      _
    // Predicated region
    $region38: #{tpu_custom_call.1} parent=1 // pred_check
      _
    $region39: #{tpu_custom_call.1} parent=1 // pred_check_branch
      %76 = sbr.rel (0) target = $region41
    $region40: #{tpu_custom_call.1} parent=1 // pred_region
      %77 = dma.done [#allocation5], 1024
    $region41: #{tpu_custom_call.1} parent=1 // pred_fallthru
      _
    // Predicated region
    $region42: #{tpu_custom_call.1} parent=1 // pred_check
      _
    $region43: #{tpu_custom_call.1} parent=1 // pred_check_branch
      %79 = sbr.rel (0) target = $region45
    $region44: #{tpu_custom_call.1} parent=1 // pred_region
      %80 = dma.done [#allocation8], 1024
    $region45: #{tpu_custom_call.1} parent=1 // pred_fallthru
      _
    %v82 = vld [vmem:[#allocation2] sm:$0xff]
    %v83 = vld [vmem:[#allocation2 + $0x8] sm:$0xff]
    %v84 = vpack.c.bf16 %v83, %v82
    %v85 = vld [vmem:[#allocation4] sm:$0xf]
    %v86 = vld [vmem:[#allocation4 + $0x4] sm:$0xf]
    %v87 = vld [vmem:[%s2] sm:$0x1]
    %v89 = vlaneseq
    %v90 = vshrl.u32 %v89, 7
    %v91 = vsub.s32 0, %v90
    %v92 = vrot.slane %v87, %v91
    %v96 = vunpack.c.l.b16 %v85
    %v97 = vunpack.c.l.b16 %v86
    %v98 = vpack.c.b16 %v97, %v96
    %vm100 = vcmask 130048
    %v102 = vsel %vm100, %v84, 0
    %104 = vmatprep.subr.bf16.mxu0 0
    %105 = vmatpush1.bf16.msra.mxu0 0
    %106 = vmatprep.subr.bf16.mxu0 0
    %107 = vmatpush1.bf16.msra.mxu0 0
    %108 = vmatprep.subr.bf16.mxu0 0
    %109 = vmatpush1.bf16.msra.mxu0 0
    %110 = vmatprep.subr.bf16.mxu0 0
    %111 = vmatpush1.bf16.msra.mxu0 0
    %112 = vmatprep.subr.bf16.mxu0 0
    %113 = vmatpush1.bf16.msra.mxu0 0
    %114 = vmatprep.subr.bf16.mxu0 0
    %115 = vmatpush1.bf16.msra.mxu0 0
    %116 = vmatprep.subr.bf16.mxu0 0
    %117 = vmatpush1.bf16.msra.mxu0 0
    %118 = vmatprep.subr.bf16.mxu0 0
    %119 = vmatpush1.bf16.msra.mxu0 %v98
    %120 = vmatprep.subr.bf16.mxu0 0
    %121 = vmatpush2.bf16.msra.mxu0 0
    %122 = vmatprep.subr.bf16.mxu0 0
    %123 = vmatpush2.bf16.msra.mxu0 0
    %124 = vmatprep.subr.bf16.mxu0 0
    %125 = vmatpush2.bf16.msra.mxu0 0
    %126 = vmatprep.subr.bf16.mxu0 0
    %127 = vmatpush2.bf16.msra.mxu0 0
    %128 = vmatprep.subr.bf16.mxu0 0
    %129 = vmatpush2.bf16.msra.mxu0 0
    %130 = vmatprep.subr.bf16.mxu0 0
    %131 = vmatpush2.bf16.msra.mxu0 0
    %132 = vmatprep.subr.bf16.mxu0 0
    %133 = vmatpush2.bf16.msra.mxu0 0
    %134 = vmatprep.subr.bf16.mxu0 0
    %135 = vmatpush2.bf16.msra.mxu0 0
    %136 = vmatprep.mubr.bf16.mxu0 0
    %137 = vmatmul.mubr.bf16.gmra.mxu0 %v102
    %v138 = vpop.f32.mrf.mxu0
    %v139 = vadd.f32 %v92, %v138
    %v140 = vpop.f32.mrf.mxu0
    %v141 = vpop.f32.mrf.mxu0
    %v142 = vadd.f32 %v92, %v141
    %v143 = vpop.f32.mrf.mxu0
    %144 = vdwg.mxu0
    %v145 = vmax.f32 %v139, 0.0
    %v146 = vmax.f32 %v142, 0.0
    %v147 = vpack.c.bf16 %v146, %v145
    %v148 = vld [vmem:[#allocation6] sm:$0xf]
    %v149 = vld [vmem:[#allocation6 + $0x4] sm:$0xf]
    %v150 = vld [vmem:[#allocation6 + $0x8] sm:$0xf]
    %v151 = vld [vmem:[#allocation6 + $0xc] sm:$0xf]
    %v152 = vld [vmem:[#allocation6 + $0x10] sm:$0xf]
    %v153 = vld [vmem:[#allocation6 + $0x14] sm:$0xf]
    %v154 = vld [vmem:[#allocation6 + $0x18] sm:$0xf]
    %v155 = vld [vmem:[#allocation6 + $0x1c] sm:$0xf]
    %v156 = vld [vmem:[#allocation6 + $0x20] sm:$0xf]
    %v157 = vld [vmem:[#allocation6 + $0x24] sm:$0xf]
    %v158 = vld [vmem:[#allocation6 + $0x28] sm:$0xf]
    %v159 = vld [vmem:[#allocation6 + $0x2c] sm:$0xf]
    %v160 = vld [vmem:[#allocation6 + $0x30] sm:$0xf]
    %v161 = vld [vmem:[#allocation6 + $0x34] sm:$0xf]
    %v162 = vld [vmem:[#allocation6 + $0x38] sm:$0xf]
    %v163 = vld [vmem:[#allocation6 + $0x3c] sm:$0xf]
    %v164 = vld [vmem:[%s4] sm:$0x1]
    %v166 = vlaneseq
    %v167 = vshrl.u32 %v166, 7
    %v168 = vsub.s32 0, %v167
    %v169 = vrot.slane %v164, %v168
    %v187 = vunpack.c.l.b16 %v148
    %v188 = vunpack.c.l.b16 %v149
    %v189 = vunpack.c.l.b16 %v150
    %v190 = vunpack.c.l.b16 %v151
    %v191 = vunpack.c.l.b16 %v152
    %v192 = vunpack.c.l.b16 %v153
    %v193 = vunpack.c.l.b16 %v154
    %v194 = vunpack.c.l.b16 %v155
    %v195 = vunpack.c.l.b16 %v156
    %v196 = vunpack.c.l.b16 %v157
    %v197 = vunpack.c.l.b16 %v158
    %v198 = vunpack.c.l.b16 %v159
    %v199 = vunpack.c.l.b16 %v160
    %v200 = vunpack.c.l.b16 %v161
    %v201 = vunpack.c.l.b16 %v162
    %v202 = vunpack.c.l.b16 %v163
    %v203 = vpack.c.b16 %v188, %v187
    %v204 = vpack.c.b16 %v190, %v189
    %v205 = vpack.c.b16 %v192, %v191
    %v206 = vpack.c.b16 %v194, %v193
    %v207 = vpack.c.b16 %v196, %v195
    %v208 = vpack.c.b16 %v198, %v197
    %v209 = vpack.c.b16 %v200, %v199
    %v210 = vpack.c.b16 %v202, %v201
    %219 = vmatprep.subr.bf16.mxu0 0
    %220 = vmatpush1.bf16.msra.mxu0 %v210
    %221 = vmatprep.subr.bf16.mxu0 0
    %222 = vmatpush1.bf16.msra.mxu0 %v209
    %223 = vmatprep.subr.bf16.mxu0 0
    %224 = vmatpush1.bf16.msra.mxu0 %v208
    %225 = vmatprep.subr.bf16.mxu0 0
    %226 = vmatpush1.bf16.msra.mxu0 %v207
    %227 = vmatprep.subr.bf16.mxu0 0
    %228 = vmatpush1.bf16.msra.mxu0 %v206
    %229 = vmatprep.subr.bf16.mxu0 0
    %230 = vmatpush1.bf16.msra.mxu0 %v205
    %231 = vmatprep.subr.bf16.mxu0 0
    %232 = vmatpush1.bf16.msra.mxu0 %v204
    %233 = vmatprep.subr.bf16.mxu0 0
    %234 = vmatpush1.bf16.msra.mxu0 %v203
    %235 = vmatprep.subr.bf16.mxu0 0
    %236 = vmatpush2.bf16.msra.mxu0 0
    %237 = vmatprep.subr.bf16.mxu0 0
    %238 = vmatpush2.bf16.msra.mxu0 0
    %239 = vmatprep.subr.bf16.mxu0 0
    %240 = vmatpush2.bf16.msra.mxu0 0
    %241 = vmatprep.subr.bf16.mxu0 0
    %242 = vmatpush2.bf16.msra.mxu0 0
    %243 = vmatprep.subr.bf16.mxu0 0
    %244 = vmatpush2.bf16.msra.mxu0 0
    %245 = vmatprep.subr.bf16.mxu0 0
    %246 = vmatpush2.bf16.msra.mxu0 0
    %247 = vmatprep.subr.bf16.mxu0 0
    %248 = vmatpush2.bf16.msra.mxu0 0
    %249 = vmatprep.subr.bf16.mxu0 0
    %250 = vmatpush2.bf16.msra.mxu0 0
    %251 = vmatprep.mubr.bf16.mxu0 0
    %252 = vmatmul.mubr.bf16.gmra.mxu0 %v147
    %v253 = vpop.f32.mrf.mxu0
    %v254 = vadd.f32 %v169, %v253
    %v255 = vpop.f32.mrf.mxu0
    %v256 = vpop.f32.mrf.mxu0
    %v257 = vadd.f32 %v169, %v256
    %v258 = vpop.f32.mrf.mxu0
    %259 = vdwg.mxu0
    %v260 = vmax.f32 %v254, 0.0
    %v261 = vmax.f32 %v257, 0.0
    %v262 = vpack.c.bf16 %v261, %v260
    %v263 = vld [vmem:[#allocation7] sm:$0xf]
    %v264 = vld [vmem:[#allocation7 + $0x4] sm:$0xf]
    %v265 = vld [vmem:[#allocation7 + $0x8] sm:$0xf]
    %v266 = vld [vmem:[#allocation7 + $0xc] sm:$0xf]
    %v267 = vld [vmem:[#allocation7 + $0x10] sm:$0xf]
    %v268 = vld [vmem:[#allocation7 + $0x14] sm:$0xf]
    %v269 = vld [vmem:[#allocation7 + $0x18] sm:$0xf]
    %v270 = vld [vmem:[#allocation7 + $0x1c] sm:$0xf]
    %v271 = vld [vmem:[#allocation7 + $0x20] sm:$0xf]
    %v272 = vld [vmem:[#allocation7 + $0x24] sm:$0xf]
    %v273 = vld [vmem:[#allocation7 + $0x28] sm:$0xf]
    %v274 = vld [vmem:[#allocation7 + $0x2c] sm:$0xf]
    %v275 = vld [vmem:[#allocation7 + $0x30] sm:$0xf]
    %v276 = vld [vmem:[#allocation7 + $0x34] sm:$0xf]
    %v277 = vld [vmem:[#allocation7 + $0x38] sm:$0xf]
    %v278 = vld [vmem:[#allocation7 + $0x3c] sm:$0xf]
    %v295 = vunpack.c.l.b16 %v263
    %v296 = vunpack.c.l.b16 %v264
    %v297 = vunpack.c.l.b16 %v265
    %v298 = vunpack.c.l.b16 %v266
    %v299 = vunpack.c.l.b16 %v267
    %v300 = vunpack.c.l.b16 %v268
    %v301 = vunpack.c.l.b16 %v269
    %v302 = vunpack.c.l.b16 %v270
    %v303 = vunpack.c.l.b16 %v271
    %v304 = vunpack.c.l.b16 %v272
    %v305 = vunpack.c.l.b16 %v273
    %v306 = vunpack.c.l.b16 %v274
    %v307 = vunpack.c.l.b16 %v275
    %v308 = vunpack.c.l.b16 %v276
    %v309 = vunpack.c.l.b16 %v277
    %v310 = vunpack.c.l.b16 %v278
    %v311 = vpack.c.b16 %v296, %v295
    %v312 = vpack.c.b16 %v298, %v297
    %v313 = vpack.c.b16 %v300, %v299
    %v314 = vpack.c.b16 %v302, %v301
    %v315 = vpack.c.b16 %v304, %v303
    %v316 = vpack.c.b16 %v306, %v305
    %v317 = vpack.c.b16 %v308, %v307
    %v318 = vpack.c.b16 %v310, %v309
    %327 = vmatprep.subr.bf16.mxu0 0
    %328 = vmatpush1.bf16.msra.mxu0 %v318
    %329 = vmatprep.subr.bf16.mxu0 0
    %330 = vmatpush1.bf16.msra.mxu0 %v317
    %331 = vmatprep.subr.bf16.mxu0 0
    %332 = vmatpush1.bf16.msra.mxu0 %v316
    %333 = vmatprep.subr.bf16.mxu0 0
    %334 = vmatpush1.bf16.msra.mxu0 %v315
    %335 = vmatprep.subr.bf16.mxu0 0
    %336 = vmatpush1.bf16.msra.mxu0 %v314
    %337 = vmatprep.subr.bf16.mxu0 0
    %338 = vmatpush1.bf16.msra.mxu0 %v313
    %339 = vmatprep.subr.bf16.mxu0 0
    %340 = vmatpush1.bf16.msra.mxu0 %v312
    %341 = vmatprep.subr.bf16.mxu0 0
    %342 = vmatpush1.bf16.msra.mxu0 %v311
    %343 = vmatprep.subr.bf16.mxu0 0
    %344 = vmatpush2.bf16.msra.mxu0 0
    %345 = vmatprep.subr.bf16.mxu0 0
    %346 = vmatpush2.bf16.msra.mxu0 0
    %347 = vmatprep.subr.bf16.mxu0 0
    %348 = vmatpush2.bf16.msra.mxu0 0
    %349 = vmatprep.subr.bf16.mxu0 0
    %350 = vmatpush2.bf16.msra.mxu0 0
    %351 = vmatprep.subr.bf16.mxu0 0
    %352 = vmatpush2.bf16.msra.mxu0 0
    %353 = vmatprep.subr.bf16.mxu0 0
    %354 = vmatpush2.bf16.msra.mxu0 0
    %355 = vmatprep.subr.bf16.mxu0 0
    %356 = vmatpush2.bf16.msra.mxu0 0
    %357 = vmatprep.subr.bf16.mxu0 0
    %358 = vmatpush2.bf16.msra.mxu0 0
    %359 = vmatprep.mubr.bf16.mxu0 0
    %360 = vmatmul.mubr.bf16.gmra.mxu0 %v262
    %v361 = vpop.f32.mrf.mxu0
    %v362 = vadd.f32 0.0, %v361
    %v363 = vpop.f32.mrf.mxu0
    %v364 = vpop.f32.mrf.mxu0
    %v365 = vadd.f32 0.0, %v364
    %v366 = vpop.f32.mrf.mxu0
    %367 = vdwg.mxu0
    %v368 = vld [vmem:[%s6] sm:$0x1]
    %v370 = vlaneseq
    %v371 = vshrl.u32 %v370, 7
    %v372 = vsub.s32 0, %v371
    %v373 = vrot.slane %v368, %v372
    %v375 = vadd.f32 %v362, %v373
    %v376 = vadd.f32 %v365, %v373
    %v377 = vtanh.pop %v375
    %v378 = vtanh.pop %v376
    %vm379 = vcmask 15360
    %380 = vst.msk [vmem:[%s7] sm:$0xff] %vm379, %v377
    %381 = vst.msk [vmem:[%s7 + $0x8] sm:$0xff] %vm379, %v378
    // Predicated region
    $region46: #{tpu_custom_call.1} parent=1 // pred_check
      _
    $region47: #{tpu_custom_call.1} parent=1 // pred_check_branch
      %383 = sbr.rel (0) target = $region49
    $region48: #{tpu_custom_call.1} parent=1 // pred_region
      _
    $region49: #{tpu_custom_call.1} parent=1 // pred_fallthru
      _
    // Predicated region
    $region50: #{tpu_custom_call.1} parent=1 // pred_check
      _
    $region51: #{tpu_custom_call.1} parent=1 // pred_check_branch
      %385 = sbr.rel (0) target = $region53
    $region52: #{tpu_custom_call.1} parent=1 // pred_region
      _
    $region53: #{tpu_custom_call.1} parent=1 // pred_fallthru
      _
    %386 = vsyncpa [#allocation3], 1
    %387 = vsyncpa [#allocation5], 1
    %388 = vsyncpa [#allocation8], 1

</llo_original>
